<compile_context>
chip_gen: v6e
topology: v6e:2x2x1
jax: 0.10.0
libtpu: 0.0.40
codegen_flags: <defaults>
</compile_context>

<pallas_src>
import jax
import jax.numpy as jnp
from jax.experimental import pallas as pl
from jax.experimental.pallas import tpu as pltpu


def mlp_kernel(x_ref, w1t_ref, b1_ref, w2t_ref, b2_ref, o_ref):
    """One batch tile, natural batch-major layout.

    x_ref   : (tb, D_in)  f32   input rows (no wrapper transpose)
    w1t_ref : (D_in, H)   f32   fc1.weight^T (pre-transposed host-side), VMEM resident
    b1_ref  : (1, H)      f32   VMEM resident, broadcasts over rows
    w2t_ref : (H, D_out)  f32   fc2.weight^T, VMEM resident
    b2_ref  : (1,)        f32   SMEM scalar
    o_ref   : (tb, D_out) f32
    """
    x = x_ref[...]
    # fc1: (tb, D_in) @ (D_in, H) -> (tb, H); f32 accumulate.
    h = jnp.dot(x, w1t_ref[...], preferred_element_type=jnp.float32)
    h = jnp.maximum(h + b1_ref[...], 0.0)          # bias + ReLU (VPU, f32)
    # fc2: (tb, H) @ (H, D_out) -> (tb, D_out)
    o = jnp.dot(h, w2t_ref[...], preferred_element_type=jnp.float32)
    o_ref[...] = (o + b2_ref[0]).astype(o_ref.dtype)


# Batches up to this size take the single-invocation, no-grid path.
# Padded VMEM footprint there is ~(x: 512 B + out: 512 B) per row -> <= ~8 MiB,
# safe against v5e's 16 MiB default scoped VMEM and v7x's 64 MiB physical VMEM.
_GRIDLESS_MAX_B = 8192


def _pick_batch_tile(batch):
    # Grid path only runs for batch > _GRIDLESS_MAX_B.  Target >= 4 grid steps
    # (>= 2 per TensorCore with v7x megacore sharding, and >= 2 steps so input
    # DMA overlaps compute), tile capped at 2048 rows: double-buffered padded
    # blocks stay ~4-5 MiB, well inside every generation's default scoped VMEM,
    # and 2048 rows is already past the per-step-overhead amortization knee.
    tb = (batch // 4) // 128 * 128
    return max(128, min(2048, tb))


def simple_model_forward(x, w1, b1, w2, b2):
    """x: (B, 10) f32; w1: (5, 10); b1: (5,); w2: (1, 5); b2: (1,). Returns (B, 1)."""
    B, D_in = x.shape
    H = w1.shape[0]
    D_out = w2.shape[0]

    # One-time host-side layout prep on the tiny weight tensors only.
    w1t = w1.T                     # (D_in, H)
    w2t = w2.T                     # (H, D_out)
    b1_row = b1.reshape(1, H)      # broadcasts over the batch rows in-kernel

    out_shape = jax.ShapeDtypeStruct((B, D_out), jnp.float32)
    weight_bytes = 4 * int(w1.size + b1.size + w2.size + b2.size)
    cost = pl.CostEstimate(
        flops=2 * B * (D_in * H + H * D_out),
        transcendentals=0,
        bytes_accessed=4 * B * (D_in + D_out) + weight_bytes,
    )

    if B <= _GRIDLESS_MAX_B:
        # Small / medium batch: single invocation, no grid, no pipeline
        # machinery.  Whole arrays live in VMEM; b2 is an SMEM scalar.
        return pl.pallas_call(
            mlp_kernel,
            out_shape=out_shape,
            in_specs=[
                pl.BlockSpec(memory_space=pltpu.MemorySpace.VMEM),   # x
                pl.BlockSpec(memory_space=pltpu.MemorySpace.VMEM),   # w1^T
                pl.BlockSpec(memory_space=pltpu.MemorySpace.VMEM),   # b1
                pl.BlockSpec(memory_space=pltpu.MemorySpace.VMEM),   # w2^T
                pl.BlockSpec(memory_space=pltpu.MemorySpace.SMEM),   # b2
            ],
            out_specs=pl.BlockSpec(memory_space=pltpu.MemorySpace.VMEM),
            cost_estimate=cost,
        )(x, w1t, b1_row, w2t, b2)

    # Large batch: stream batch tiles through a 1-D grid (Pallas double-buffers
    # the x / out blocks).  cdiv grid + Pallas partial edge block handles
    # batches that are not multiples of the tile (each row is independent, so
    # garbage in the out-of-bounds tail of the last block is simply dropped on
    # writeback).  Weights / b1 use constant index_maps -> fetched once, VMEM
    # resident; "parallel" lets the batch axis shard across v7x's two cores.
    tb = _pick_batch_tile(B)
    grid = (pl.cdiv(B, tb),)
    return pl.pallas_call(
        mlp_kernel,
        out_shape=out_shape,
        grid=grid,
        in_specs=[
            pl.BlockSpec((tb, D_in), lambda i: (i, 0)),              # x tile
            pl.BlockSpec((D_in, H), lambda i: (0, 0)),               # w1^T resident
            pl.BlockSpec((1, H), lambda i: (0, 0)),                  # b1 resident
            pl.BlockSpec((H, D_out), lambda i: (0, 0)),              # w2^T resident
            pl.BlockSpec(memory_space=pltpu.MemorySpace.SMEM),       # b2 scalar
        ],
        out_specs=pl.BlockSpec((tb, D_out), lambda i: (i, 0)),
        compiler_params=pltpu.CompilerParams(
            dimension_semantics=("parallel",)),
        cost_estimate=cost,
    )(x, w1t, b1_row, w2t, b2)


def init_params(key):
    # Deterministic init matching PyTorch Linear shapes (native orientation):
    #   fc1: weight (5, 10), bias (5,)
    #   fc2: weight (1, 5),  bias (1,)
    k1, k2, k3, k4 = jax.random.split(key, 4)
    bound1 = 1.0 / jnp.sqrt(10.0)
    bound2 = 1.0 / jnp.sqrt(5.0)
    w1 = jax.random.uniform(k1, (5, 10), jnp.float32, -bound1, bound1)
    b1 = jax.random.uniform(k2, (5,), jnp.float32, -bound1, bound1)
    w2 = jax.random.uniform(k3, (1, 5), jnp.float32, -bound2, bound2)
    b2 = jax.random.uniform(k4, (1,), jnp.float32, -bound2, bound2)
    return w1, b1, w2, b2


if __name__ == "__main__":
    key = jax.random.PRNGKey(0)
    kx_small, kx_large, kp = jax.random.split(key, 3)
    w1, b1, w2, b2 = init_params(kp)

    def reference(x):
        return jnp.maximum(x @ w1.T + b1, 0.0) @ w2.T + b2

    fwd = jax.jit(simple_model_forward)

    # Small batch -> gridless single-invocation path.
    x_small = jax.random.normal(kx_small, (8, 10), jnp.float32)
    out_small = fwd(x_small, w1, b1, w2, b2)
    jax.block_until_ready(out_small)
    assert out_small.shape == (8, 1)
    assert jnp.allclose(out_small, reference(x_small), atol=1e-4, rtol=1e-4)

    # Larger, non-multiple-of-tile batch -> batch-tiled cdiv grid path
    # (exercises the partial edge block and megacore-parallel grid).
    x_large = jax.random.normal(kx_large, (8320, 10), jnp.float32)
    out_large = fwd(x_large, w1, b1, w2, b2)
    jax.block_until_ready(out_large)
    assert out_large.shape == (8320, 1)
    assert jnp.allclose(out_large, reference(x_large), atol=1e-4, rtol=1e-4)

    print("KERNEL_OK")
</pallas_src>

<mosaic_0001>
module attributes {stable_mosaic.version = 11 : i64} {
  func.func @mlp_kernel(%arg0: memref<8x10xf32, #tpu.memory_space<vmem>>, %arg1: memref<10x5xf32, #tpu.memory_space<vmem>>, %arg2: memref<1x5xf32, #tpu.memory_space<vmem>>, %arg3: memref<5x1xf32, #tpu.memory_space<vmem>>, %arg4: memref<1xf32, #tpu.memory_space<smem>>, %arg5: memref<8x1xf32, #tpu.memory_space<vmem>>) attributes {dimension_semantics = [], scalar_prefetch = 0 : i64, scratch_operands = 0 : i64, tpu.core_type = #tpu.core_type<tc>} {
    %c0 = arith.constant 0 : index
    %c0_0 = arith.constant 0 : index
    %0 = vector.load %arg0[%c0, %c0_0] : memref<8x10xf32, #tpu.memory_space<vmem>>, vector<8x10xf32>
    %c0_1 = arith.constant 0 : index
    %c0_2 = arith.constant 0 : index
    %1 = vector.load %arg1[%c0_1, %c0_2] : memref<10x5xf32, #tpu.memory_space<vmem>>, vector<10x5xf32>
    %cst = arith.constant dense<0.000000e+00> : vector<8x5xf32>
    %2 = tpu.matmul %0, %1, %cst {dimension_numbers = #tpu.dot_dimension_numbers<[1], [0], [0], [1], [0, 0, 1, 1], [], []>} : vector<8x10xf32>, vector<10x5xf32>, vector<8x5xf32> -> vector<8x5xf32>
    %c0_3 = arith.constant 0 : index
    %c0_4 = arith.constant 0 : index
    %3 = vector.load %arg2[%c0_3, %c0_4] : memref<1x5xf32, #tpu.memory_space<vmem>>, vector<1x5xf32>
    %4 = vector.broadcast %3 : vector<1x5xf32> to vector<8x5xf32>
    %5 = arith.addf %2, %4 : vector<8x5xf32>
    %cst_5 = arith.constant 0.000000e+00 : f32
    %6 = vector.broadcast %cst_5 : f32 to vector<8x5xf32>
    %7 = arith.maximumf %5, %6 : vector<8x5xf32>
    %c0_6 = arith.constant 0 : index
    %c0_7 = arith.constant 0 : index
    %8 = vector.load %arg3[%c0_6, %c0_7] : memref<5x1xf32, #tpu.memory_space<vmem>>, vector<5x1xf32>
    %cst_8 = arith.constant dense<0.000000e+00> : vector<8x1xf32>
    %9 = tpu.matmul %7, %8, %cst_8 {dimension_numbers = #tpu.dot_dimension_numbers<[1], [0], [0], [1], [0, 0, 1, 1], [], []>} : vector<8x5xf32>, vector<5x1xf32>, vector<8x1xf32> -> vector<8x1xf32>
    %c0_9 = arith.constant 0 : index
    %10 = memref.load %arg4[%c0_9] : memref<1xf32, #tpu.memory_space<smem>>
    %11 = vector.broadcast %10 : f32 to vector<8x1xf32>
    %12 = arith.addf %9, %11 : vector<8x1xf32>
    %c0_10 = arith.constant 0 : index
    %c0_11 = arith.constant 0 : index
    %13 = vector.load %arg5[%c0_10, %c0_11] : memref<8x1xf32, #tpu.memory_space<vmem>>, vector<8x1xf32>
    tpu.vector_store %arg5[%c0_10, %c0_11], %12 {strides = array<i32>} : memref<8x1xf32, #tpu.memory_space<vmem>>, vector<8x1xf32>,
    return
  }
}

</mosaic_0001>

<llo_original>
// kernel: simple_model_forward.1
$region0: #{simple_model_forward.1}
  #allocation0 [shape = 'u32[]', space=smem, size = 0x4, offset = 0x4, fixed_abs, tag = 'smem constant byte address 0x4 - core index']
  #allocation1 [shape = 'u32[144,128]{1,0:T(1,128)}', space=vmem, size = 0x12000, scoped, tag = 'internal scratch']
  #allocation2 [shape = 'f32[1]{0:T(128)S(6)}', space=smem, size = 0x200, scoped, tag = 'scoped memory for simple_model_forward.1']
  %s0 = inlined_call_operand.vmem [shape: f32[8,10], index: 0, kind: input, shape index: {}]
  %s1 = inlined_call_operand.vmem [shape: f32[10,5], index: 1, kind: input, shape index: {}]
  %s2 = inlined_call_operand.vmem [shape: f32[1,5], index: 2, kind: input, shape index: {}]
  %s3 = inlined_call_operand.vmem [shape: f32[5,1], index: 3, kind: input, shape index: {}]
  %s4 = inlined_call_operand.<no memory space> [shape: f32[1], index: 4, kind: input, shape index: {}]
  %s5 = inlined_call_operand.vmem [shape: f32[8,1], index: 5, kind: output, shape index: {}]
  %s6 = sld [smem:[#allocation0]]
  $region30: #{simple_model_forward.1} parent=0
    _
  %s8 = ssub.s32 1, %s6
  %s9 = scalar_select 0, %s8, %s6
  %10 = sst [smem:[#allocation2]] %s4
  // Predicated region
  $region2: #{simple_model_forward.1} parent=0 // pred_check
    _
  $region3: #{simple_model_forward.1} parent=0 // pred_check_branch
    %12 = sbr.rel (0) target = $region5
  $region4: #{simple_model_forward.1} parent=0 // pred_region
    _
  $region5: #{simple_model_forward.1} parent=0 // pred_fallthru
    _
  // Predicated region
  $region6: #{simple_model_forward.1} parent=0 // pred_check
    _
  $region7: #{simple_model_forward.1} parent=0 // pred_check_branch
    %14 = sbr.rel (0) target = $region9
  $region8: #{simple_model_forward.1} parent=0 // pred_region
    _
  $region9: #{simple_model_forward.1} parent=0 // pred_fallthru
    _
  // Predicated region
  $region10: #{simple_model_forward.1} parent=0 // pred_check
    _
  $region11: #{simple_model_forward.1} parent=0 // pred_check_branch
    %16 = sbr.rel (0) target = $region13
  $region12: #{simple_model_forward.1} parent=0 // pred_region
    _
  $region13: #{simple_model_forward.1} parent=0 // pred_fallthru
    _
  // Predicated region
  $region14: #{simple_model_forward.1} parent=0 // pred_check
    _
  $region15: #{simple_model_forward.1} parent=0 // pred_check_branch
    %18 = sbr.rel (0) target = $region17
  $region16: #{simple_model_forward.1} parent=0 // pred_region
    _
  $region17: #{simple_model_forward.1} parent=0 // pred_fallthru
    _
  // Predicated region
  $region18: #{simple_model_forward.1} parent=0 // pred_check
    _
  $region19: #{simple_model_forward.1} parent=0 // pred_check_branch
    %20 = sbr.rel (0) target = $region21
  $region20: #{simple_model_forward.1} parent=0 // pred_region
    _
  $region21: #{simple_model_forward.1} parent=0 // pred_fallthru
    _
  %v21 = vld [vmem:[%s0] sm:$0xff]
  %v22 = vld [vmem:[%s1] sm:$0xff]
  %v23 = vld [vmem:[%s1 + $0x8] sm:$0x3]
  %v24 = vld [vmem:[%s2] sm:$0x1]
  %v26 = vlaneseq
  %v27 = vshrl.u32 %v26, 7
  %v28 = vsub.s32 0, %v27
  %v29 = vrot.slane %v24, %v28
  %vm31 = vcmask 80896
  %v33 = vsel %vm31, %v21, 0
  %vm35 = vcmask 1041408
  %v37 = vsel %vm35, %v23, 0
  %39 = vmatprep.subr.mxu0 0.0
  %40 = vmatpush1.msra.mxu0 0.0
  %41 = vmatprep.subr.mxu0 0.0
  %42 = vmatpush1.msra.mxu0 0.0
  %43 = vmatprep.subr.mxu0 0.0
  %44 = vmatpush1.msra.mxu0 0.0
  %45 = vmatprep.subr.mxu0 0.0
  %46 = vmatpush1.msra.mxu0 0.0
  %47 = vmatprep.subr.mxu0 0.0
  %48 = vmatpush1.msra.mxu0 0.0
  %49 = vmatprep.subr.mxu0 0.0
  %50 = vmatpush1.msra.mxu0 0.0
  %51 = vmatprep.subr.mxu0 0.0
  %52 = vmatpush1.msra.mxu0 0.0
  %53 = vmatprep.subr.mxu0 0.0
  %54 = vmatpush1.msra.mxu0 0.0
  %55 = vmatprep.subr.mxu0 0.0
  %56 = vmatpush1.msra.mxu0 0.0
  %57 = vmatprep.subr.mxu0 0.0
  %58 = vmatpush1.msra.mxu0 0.0
  %59 = vmatprep.subr.mxu0 0.0
  %60 = vmatpush1.msra.mxu0 0.0
  %61 = vmatprep.subr.mxu0 0.0
  %62 = vmatpush1.msra.mxu0 0.0
  %63 = vmatprep.subr.mxu0 0.0
  %64 = vmatpush1.msra.mxu0 0.0
  %65 = vmatprep.subr.mxu0 0.0
  %66 = vmatpush1.msra.mxu0 0.0
  %67 = vmatprep.subr.mxu0 0.0
  %68 = vmatpush1.msra.mxu0 %v37
  %69 = vmatprep.subr.mxu0 0.0
  %70 = vmatpush1.msra.mxu0 %v22
  %71 = vmatprep.subr.mxu0 0.0
  %72 = vmatpush2.msra.mxu0 0.0
  %73 = vmatprep.subr.mxu0 0.0
  %74 = vmatpush2.msra.mxu0 0.0
  %75 = vmatprep.subr.mxu0 0.0
  %76 = vmatpush2.msra.mxu0 0.0
  %77 = vmatprep.subr.mxu0 0.0
  %78 = vmatpush2.msra.mxu0 0.0
  %79 = vmatprep.subr.mxu0 0.0
  %80 = vmatpush2.msra.mxu0 0.0
  %81 = vmatprep.subr.mxu0 0.0
  %82 = vmatpush2.msra.mxu0 0.0
  %83 = vmatprep.subr.mxu0 0.0
  %84 = vmatpush2.msra.mxu0 0.0
  %85 = vmatprep.subr.mxu0 0.0
  %86 = vmatpush2.msra.mxu0 0.0
  %87 = vmatprep.subr.mxu0 0.0
  %88 = vmatpush2.msra.mxu0 0.0
  %89 = vmatprep.subr.mxu0 0.0
  %90 = vmatpush2.msra.mxu0 0.0
  %91 = vmatprep.subr.mxu0 0.0
  %92 = vmatpush2.msra.mxu0 0.0
  %93 = vmatprep.subr.mxu0 0.0
  %94 = vmatpush2.msra.mxu0 0.0
  %95 = vmatprep.subr.mxu0 0.0
  %96 = vmatpush2.msra.mxu0 0.0
  %97 = vmatprep.subr.mxu0 0.0
  %98 = vmatpush2.msra.mxu0 0.0
  %99 = vmatprep.subr.mxu0 0.0
  %100 = vmatpush2.msra.mxu0 0.0
  %101 = vmatprep.subr.mxu0 0.0
  %102 = vmatpush2.msra.mxu0 0.0
  %103 = vmatprep.mubr.f32.mxu0 0.0
  %104 = vmatmul.mubr.f32.gmra.mxu0 %v33
  %v105 = vpop.f32.mrf.mxu0
  %v106 = vadd.f32 %v29, %v105
  %v107 = vpop.f32.mrf.mxu0
  %108 = vdwg.mxu0
  %v109 = vmax.f32 %v106, 0.0
  %v110 = vld [vmem:[%s3] sm:$0x1f]
  %s111 = sld [smem:[#allocation2]]
  %v112 = vstv %s111
  %vm113 = vcmask 39936
  %v115 = vsel %vm113, %v109, 0
  %vm117 = vcmask 1044480
  %v119 = vsel %vm117, %v110, 0
  %121 = vmatprep.subr.mxu0 0.0
  %122 = vmatpush1.msra.mxu0 0.0
  %123 = vmatprep.subr.mxu0 0.0
  %124 = vmatpush1.msra.mxu0 0.0
  %125 = vmatprep.subr.mxu0 0.0
  %126 = vmatpush1.msra.mxu0 0.0
  %127 = vmatprep.subr.mxu0 0.0
  %128 = vmatpush1.msra.mxu0 0.0
  %129 = vmatprep.subr.mxu0 0.0
  %130 = vmatpush1.msra.mxu0 0.0
  %131 = vmatprep.subr.mxu0 0.0
  %132 = vmatpush1.msra.mxu0 0.0
  %133 = vmatprep.subr.mxu0 0.0
  %134 = vmatpush1.msra.mxu0 0.0
  %135 = vmatprep.subr.mxu0 0.0
  %136 = vmatpush1.msra.mxu0 0.0
  %137 = vmatprep.subr.mxu0 0.0
  %138 = vmatpush1.msra.mxu0 0.0
  %139 = vmatprep.subr.mxu0 0.0
  %140 = vmatpush1.msra.mxu0 0.0
  %141 = vmatprep.subr.mxu0 0.0
  %142 = vmatpush1.msra.mxu0 0.0
  %143 = vmatprep.subr.mxu0 0.0
  %144 = vmatpush1.msra.mxu0 0.0
  %145 = vmatprep.subr.mxu0 0.0
  %146 = vmatpush1.msra.mxu0 0.0
  %147 = vmatprep.subr.mxu0 0.0
  %148 = vmatpush1.msra.mxu0 0.0
  %149 = vmatprep.subr.mxu0 0.0
  %150 = vmatpush1.msra.mxu0 0.0
  %151 = vmatprep.subr.mxu0 0.0
  %152 = vmatpush1.msra.mxu0 %v119
  %153 = vmatprep.subr.mxu0 0.0
  %154 = vmatpush2.msra.mxu0 0.0
  %155 = vmatprep.subr.mxu0 0.0
  %156 = vmatpush2.msra.mxu0 0.0
  %157 = vmatprep.subr.mxu0 0.0
  %158 = vmatpush2.msra.mxu0 0.0
  %159 = vmatprep.subr.mxu0 0.0
  %160 = vmatpush2.msra.mxu0 0.0
  %161 = vmatprep.subr.mxu0 0.0
  %162 = vmatpush2.msra.mxu0 0.0
  %163 = vmatprep.subr.mxu0 0.0
  %164 = vmatpush2.msra.mxu0 0.0
  %165 = vmatprep.subr.mxu0 0.0
  %166 = vmatpush2.msra.mxu0 0.0
  %167 = vmatprep.subr.mxu0 0.0
  %168 = vmatpush2.msra.mxu0 0.0
  %169 = vmatprep.subr.mxu0 0.0
  %170 = vmatpush2.msra.mxu0 0.0
  %171 = vmatprep.subr.mxu0 0.0
  %172 = vmatpush2.msra.mxu0 0.0
  %173 = vmatprep.subr.mxu0 0.0
  %174 = vmatpush2.msra.mxu0 0.0
  %175 = vmatprep.subr.mxu0 0.0
  %176 = vmatpush2.msra.mxu0 0.0
  %177 = vmatprep.subr.mxu0 0.0
  %178 = vmatpush2.msra.mxu0 0.0
  %179 = vmatprep.subr.mxu0 0.0
  %180 = vmatpush2.msra.mxu0 0.0
  %181 = vmatprep.subr.mxu0 0.0
  %182 = vmatpush2.msra.mxu0 0.0
  %183 = vmatprep.subr.mxu0 0.0
  %184 = vmatpush2.msra.mxu0 0.0
  %185 = vmatprep.mubr.f32.mxu0 0.0
  %186 = vmatmul.mubr.f32.gmra.mxu0 %v115
  %v187 = vpop.f32.mrf.mxu0
  %v188 = vadd.f32 %v112, %v187
  %v189 = vpop.f32.mrf.mxu0
  %190 = vdwg.mxu0
  %vm191 = vcmask 7168
  %192 = vst.msk [vmem:[%s5] sm:$0xff] %vm191, %v188
  // Predicated region
  $region22: #{simple_model_forward.1} parent=0 // pred_check
    _
  $region23: #{simple_model_forward.1} parent=0 // pred_check_branch
    %194 = sbr.rel (0) target = $region25
  $region24: #{simple_model_forward.1} parent=0 // pred_region
    _
  $region25: #{simple_model_forward.1} parent=0 // pred_fallthru
    _
  // Predicated region
  $region26: #{simple_model_forward.1} parent=0 // pred_check
    _
  $region27: #{simple_model_forward.1} parent=0 // pred_check_branch
    %196 = sbr.rel (0) target = $region29
  $region28: #{simple_model_forward.1} parent=0 // pred_region
    _
  $region29: #{simple_model_forward.1} parent=0 // pred_fallthru
    _

</llo_original>
